<compile_context>
chip_gen: v7x
topology: tpu7x:2x2x1
jax: 0.10.0
libtpu: 0.0.40
codegen_flags: <defaults>
</compile_context>

<pallas_src>
import functools

import jax
import jax.numpy as jnp
from jax.experimental import pallas as pl
from jax.experimental.pallas import tpu as pltpu


ALPHA = 0.7
BETA = 0.3
TEMP = 1.0

_LANE = 128


def _round_up(x, m):
    return (x + m - 1) // m * m


def _composite_loss_kernel(p_ref, t_ref, out_ref, acc_ref, *,
                           C, tb, B, e_scale, t_scale, c_scale, temp):
    """One batch tile.

    p_ref/t_ref: (C+1, tb)  pred/true slab, batch on the lane axis
                 (rows 0..C-1 = emissions, row C = total).
    out_ref:     (1, 1, 1)  per-core partial loss (written at finalize only).
    acc_ref:     (C+2, tb)  f32 scratch; rows 0..C: squared diffs,
                 row C+1: per-lane consistency partials.
    """
    c = pl.program_id(0)          # core-split axis ("parallel")
    i = pl.program_id(1)          # batch-tile axis ("arbitrary", reduction)
    inner = pl.num_programs(1)

    @pl.when(i == 0)
    def _():
        acc_ref[...] = jnp.zeros_like(acc_ref)

    # Global (unclamped) tile id.  Tiles with tile*tb >= B (ragged tail or the
    # duplicate created by index_map clamping) get an all-false mask.
    tile = c * inner + i
    valid = B - tile * tb                                   # valid lanes here
    lane = jax.lax.broadcasted_iota(jnp.int32, (1, tb), 1)
    mask = lane < valid

    # Mask the inputs themselves so OOB garbage (possibly NaN/Inf) never
    # enters the arithmetic.
    p = jnp.where(mask, p_ref[...].astype(jnp.float32), 0.0)     # (C+1, tb)
    t = jnp.where(mask, t_ref[...].astype(jnp.float32), 0.0)

    d = p - t
    acc_ref[pl.ds(0, C + 1), :] += d * d          # rows 0..C-1: emissions, row C: total

    sum_e = jnp.sum(p[:C, :], axis=0, keepdims=True)          # (1, tb) channel sum
    pt = p[C:C + 1, :]                                         # (1, tb) pred_total
    # .detach() in the reference only affects backward; forward value identical.
    # Masked lanes: |0 - 0| / (0 + temp) == 0  (needs temp > 0).
    cons = jnp.abs(pt - sum_e) / (jnp.abs(pt) + temp)
    acc_ref[pl.ds(C + 1, 1), :] += cons

    @pl.when(i == inner - 1)
    def _():
        acc = acc_ref[...]
        sse_e = jnp.sum(acc[:C, :])
        sse_t = jnp.sum(acc[C:C + 1, :])
        cons_sum = jnp.sum(acc[C + 1:C + 2, :])
        partial = e_scale * sse_e + t_scale * sse_t + c_scale * cons_sum
        out_ref[...] = jnp.reshape(partial, (1, 1, 1)).astype(out_ref.dtype)


def _choose_tile(B, C):
    """Batch (lane) tile: ~4 MiB real data per step, VMEM working set <= ~10 MiB."""
    bytes_per_lane_data = 2 * (C + 1) * 4                        # both slabs, f32
    rows_in = _round_up(C + 1, 8)                                # sublane padding
    rows_acc = _round_up(C + 2, 8)
    bytes_per_lane_vmem = 2 * 2 * rows_in * 4 + rows_acc * 4     # dbl-buffered in + scratch
    tb = min((4 << 20) // bytes_per_lane_data,                   # amortize grid overhead
             (10 << 20) // bytes_per_lane_vmem,                  # VMEM budget (all gens)
             _round_up(B, _LANE))
    return max(_LANE, (tb // _LANE) * _LANE)


def composite_loss(pred_emissions, true_emissions, pred_total, true_total,
                   *, alpha=ALPHA, beta=BETA, temp=TEMP):
    """Pallas implementation of CompositeLoss.forward (scalar f32 result)."""
    assert temp > 0.0, "temp must be > 0 (ragged-tile masking relies on it)"
    B, C = pred_emissions.shape

    # Fold totals into the emission slabs; batch -> lanes.  XLA fuses the
    # transpose + reshape + concat + tiny pad into a single relayout pass.
    P = jnp.concatenate(
        [jnp.transpose(pred_emissions), jnp.reshape(pred_total, (1, B))], axis=0)
    T = jnp.concatenate(
        [jnp.transpose(true_emissions), jnp.reshape(true_total, (1, B))], axis=0)

    # Pad lanes to a multiple of 128 (<=127 lanes, fused & negligible) so even
    # tiny-B cases present a hardware-aligned lane extent.  NOT per-tile pad.
    b_pad = _round_up(B, _LANE)
    if b_pad != B:
        P = jnp.pad(P, ((0, 0), (0, b_pad - B)))
        T = jnp.pad(T, ((0, 0), (0, b_pad - B)))

    tb = _choose_tile(B, C)
    n_tiles = pl.cdiv(B, tb)
    inner = pl.cdiv(n_tiles, 2)         # tiles per core (leading axis of size 2)
    last_tile = n_tiles - 1

    def in_map(c, i):
        # Clamp so duplicate / past-the-end grid points still read a valid
        # block; the kernel masks their contribution to exactly 0.
        return (0, jnp.minimum(c * inner + i, last_tile))

    kernel = functools.partial(
        _composite_loss_kernel,
        C=C, tb=tb, B=B,
        e_scale=alpha / (B * C),        # emission MSE: mean over B*C elements
        t_scale=(1.0 - alpha) / B,      # total MSE: mean over B elements
        c_scale=beta / B,               # consistency: mean over B elements
        temp=temp,
    )

    out = pl.pallas_call(
        kernel,
        out_shape=jax.ShapeDtypeStruct((2, 1, 1), jnp.float32),
        grid=(2, inner),
        in_specs=[
            pl.BlockSpec((C + 1, tb), in_map),
            pl.BlockSpec((C + 1, tb), in_map),
        ],
        out_specs=pl.BlockSpec((1, 1, 1), lambda c, i: (c, 0, 0)),
        scratch_shapes=[pltpu.VMEM((C + 2, tb), jnp.float32)],
        compiler_params=pltpu.CompilerParams(
            dimension_semantics=("parallel", "arbitrary"),
            vmem_limit_bytes=32 << 20,
        ),
    )(P, T)
    return jnp.sum(out)


def composite_loss_ref(pred_emissions, true_emissions, pred_total, true_total):
    """Pure-JAX reference (mirrors the PyTorch forward exactly)."""
    emission_loss = jnp.mean((pred_emissions - true_emissions) ** 2)
    total_loss = jnp.mean((pred_total - true_total) ** 2)
    sum_emissions = jnp.sum(pred_emissions, axis=1, keepdims=True)
    consistency_loss = jnp.mean(
        jnp.abs(pred_total - sum_emissions) / (jnp.abs(pred_total) + TEMP)
    )
    return (
        ALPHA * emission_loss
        + (1.0 - ALPHA) * total_loss
        + BETA * consistency_loss
    )


if __name__ == "__main__":
    key = jax.random.PRNGKey(0)
    k1, k2, k3, k4 = jax.random.split(key, 4)

    B, C = 8, 4  # batch=8, emission channels=4
    pred_emissions = jax.random.normal(k1, (B, C), dtype=jnp.float32)
    true_emissions = jax.random.normal(k2, (B, C), dtype=jnp.float32)
    pred_total = jax.random.normal(k3, (B, 1), dtype=jnp.float32)
    true_total = jax.random.normal(k4, (B, 1), dtype=jnp.float32)

    loss = jax.jit(composite_loss)(
        pred_emissions, true_emissions, pred_total, true_total)
    loss = jax.block_until_ready(loss)

    ref = composite_loss_ref(pred_emissions, true_emissions, pred_total, true_total)
    assert jnp.allclose(loss, ref, rtol=1e-5, atol=1e-5), (loss, ref)

    print("KERNEL_OK")
</pallas_src>

<mosaic_0001>
module attributes {stable_mosaic.version = 11 : i64} {
  func.func @_composite_loss_kernel(%arg0: i32, %arg1: i32, %arg2: memref<5x128xf32, #tpu.memory_space<vmem>>, %arg3: memref<5x128xf32, #tpu.memory_space<vmem>>, %arg4: memref<1x1x1xf32, #tpu.memory_space<vmem>>, %arg5: memref<6x128xf32, #tpu.memory_space<vmem>>) attributes {dimension_semantics = [#tpu.dimension_semantics<parallel>, #tpu.dimension_semantics<arbitrary>], iteration_bounds = array<i64: 2, 1>, scalar_prefetch = 0 : i64, scratch_operands = 1 : i64, tpu.core_type = #tpu.core_type<tc>, window_params = [{transform_indices = @transform_0, window_bounds = array<i64: 5, 128>}, {transform_indices = @transform_1, window_bounds = array<i64: 5, 128>}, {transform_indices = @transform_2, window_bounds = array<i64: 1, 1, 1>}]} {
    %c0_i32 = arith.constant 0 : i32
    %0 = arith.cmpi eq, %arg1, %c0_i32 : i32
    %1 = arith.extui %0 : i1 to i32
    %c0_i32_0 = arith.constant 0 : i32
    %2 = arith.cmpi ne, %1, %c0_i32_0 : i32
    scf.if %2 {
      %cst_16 = arith.constant 0.000000e+00 : f32
      %41 = vector.broadcast %cst_16 : f32 to vector<6x128xf32>
      %c0_17 = arith.constant 0 : index
      %c0_18 = arith.constant 0 : index
      %42 = vector.load %arg5[%c0_17, %c0_18] : memref<6x128xf32, #tpu.memory_space<vmem>>, vector<6x128xf32>
      tpu.vector_store %arg5[%c0_17, %c0_18], %41 {strides = array<i32>} : memref<6x128xf32, #tpu.memory_space<vmem>>, vector<6x128xf32>,
    } else {
    }
    %c1_i32 = arith.constant 1 : i32
    %3 = arith.muli %arg0, %c1_i32 : i32
    %4 = arith.addi %3, %arg1 : i32
    %c128_i32 = arith.constant 128 : i32
    %5 = arith.muli %4, %c128_i32 : i32
    %c8_i32 = arith.constant 8 : i32
    %6 = arith.subi %c8_i32, %5 : i32
    %7 = tpu.iota {dimensions = array<i32: 1>} : vector<1x128xi32>
    %8 = vector.broadcast %6 : i32 to vector<1x128xi32>
    %9 = arith.cmpi slt, %7, %8 : vector<1x128xi32>
    %c0 = arith.constant 0 : index
    %c0_1 = arith.constant 0 : index
    %10 = vector.load %arg2[%c0, %c0_1] : memref<5x128xf32, #tpu.memory_space<vmem>>, vector<5x128xf32>
    %cst = arith.constant 0.000000e+00 : f32
    %11 = vector.shape_cast %9 : vector<1x128xi1> to vector<1x128xi1>
    %12 = vector.broadcast %11 : vector<1x128xi1> to vector<5x128xi1>
    %13 = vector.broadcast %cst : f32 to vector<5x128xf32>
    %14 = arith.select %12, %10, %13 : vector<5x128xi1>, vector<5x128xf32>
    %c0_2 = arith.constant 0 : index
    %c0_3 = arith.constant 0 : index
    %15 = vector.load %arg3[%c0_2, %c0_3] : memref<5x128xf32, #tpu.memory_space<vmem>>, vector<5x128xf32>
    %cst_4 = arith.constant 0.000000e+00 : f32
    %16 = vector.shape_cast %9 : vector<1x128xi1> to vector<1x128xi1>
    %17 = vector.broadcast %16 : vector<1x128xi1> to vector<5x128xi1>
    %18 = vector.broadcast %cst_4 : f32 to vector<5x128xf32>
    %19 = arith.select %17, %15, %18 : vector<5x128xi1>, vector<5x128xf32>
    %20 = arith.subf %14, %19 : vector<5x128xf32>
    %c0_5 = arith.constant 0 : index
    %c0_6 = arith.constant 0 : index
    %21 = vector.load %arg5[%c0_5, %c0_6] : memref<6x128xf32, #tpu.memory_space<vmem>>, vector<5x128xf32>
    %22 = arith.mulf %20, %20 : vector<5x128xf32>
    %23 = arith.addf %21, %22 : vector<5x128xf32>
    %c0_7 = arith.constant 0 : index
    %c0_8 = arith.constant 0 : index
    %24 = vector.load %arg5[%c0_7, %c0_8] : memref<6x128xf32, #tpu.memory_space<vmem>>, vector<5x128xf32>
    tpu.vector_store %arg5[%c0_7, %c0_8], %23 {strides = array<i32>} : memref<6x128xf32, #tpu.memory_space<vmem>>, vector<5x128xf32>,
    %25 = vector.extract_strided_slice %14 {offsets = [0, 0], sizes = [4, 128], strides = [1, 1]} : vector<5x128xf32> to vector<4x128xf32>
    %cst_9 = arith.constant dense<0.000000e+00> : vector<128xf32>
    %26 = vector.multi_reduction <add>, %25, %cst_9 [0] : vector<4x128xf32> to vector<128xf32>
    %27 = vector.shape_cast %26 : vector<128xf32> to vector<1x128xf32>
    %28 = vector.extract_strided_slice %14 {offsets = [4, 0], sizes = [1, 128], strides = [1, 1]} : vector<5x128xf32> to vector<1x128xf32>
    %29 = arith.subf %28, %27 : vector<1x128xf32>
    %30 = math.absf %29 : vector<1x128xf32>
    %31 = math.absf %28 : vector<1x128xf32>
    %cst_10 = arith.constant 1.000000e+00 : f32
    %32 = vector.broadcast %cst_10 : f32 to vector<1x128xf32>
    %33 = arith.addf %31, %32 : vector<1x128xf32>
    %34 = arith.divf %30, %33 : vector<1x128xf32>
    %c5 = arith.constant 5 : index
    %c0_11 = arith.constant 0 : index
    %35 = vector.load %arg5[%c5, %c0_11] : memref<6x128xf32, #tpu.memory_space<vmem>>, vector<1x128xf32>
    %36 = arith.addf %35, %34 : vector<1x128xf32>
    %c5_12 = arith.constant 5 : index
    %c0_13 = arith.constant 0 : index
    %37 = vector.load %arg5[%c5_12, %c0_13] : memref<6x128xf32, #tpu.memory_space<vmem>>, vector<1x128xf32>
    tpu.vector_store %arg5[%c5_12, %c0_13], %36 {strides = array<i32>} : memref<6x128xf32, #tpu.memory_space<vmem>>, vector<1x128xf32>,
    %c0_i32_14 = arith.constant 0 : i32
    %38 = arith.cmpi eq, %arg1, %c0_i32_14 : i32
    %39 = arith.extui %38 : i1 to i32
    %c0_i32_15 = arith.constant 0 : i32
    %40 = arith.cmpi ne, %39, %c0_i32_15 : i32
    scf.if %40 {
      %c0_16 = arith.constant 0 : index
      %c0_17 = arith.constant 0 : index
      %41 = vector.load %arg5[%c0_16, %c0_17] : memref<6x128xf32, #tpu.memory_space<vmem>>, vector<6x128xf32>
      %42 = vector.extract_strided_slice %41 {offsets = [0, 0], sizes = [4, 128], strides = [1, 1]} : vector<6x128xf32> to vector<4x128xf32>
      %43 = vector.shape_cast %42 : vector<4x128xf32> to vector<1x4x128xf32>
      %cst_18 = arith.constant dense<0.000000e+00> : vector<1xf32>
      %44 = vector.multi_reduction <add>, %43, %cst_18 [1, 2] : vector<1x4x128xf32> to vector<1xf32>
      %45 = vector.shape_cast %44 : vector<1xf32> to vector<1x1x1xf32>
      %46 = vector.extract %45[0, 0, 0] : f32 from vector<1x1x1xf32>
      %47 = vector.extract_strided_slice %41 {offsets = [4, 0], sizes = [1, 128], strides = [1, 1]} : vector<6x128xf32> to vector<1x128xf32>
      %48 = vector.shape_cast %47 : vector<1x128xf32> to vector<1x1x128xf32>
      %cst_19 = arith.constant dense<0.000000e+00> : vector<1xf32>
      %49 = vector.multi_reduction <add>, %48, %cst_19 [1, 2] : vector<1x1x128xf32> to vector<1xf32>
      %50 = vector.shape_cast %49 : vector<1xf32> to vector<1x1x1xf32>
      %51 = vector.extract %50[0, 0, 0] : f32 from vector<1x1x1xf32>
      %52 = vector.extract_strided_slice %41 {offsets = [5, 0], sizes = [1, 128], strides = [1, 1]} : vector<6x128xf32> to vector<1x128xf32>
      %53 = vector.shape_cast %52 : vector<1x128xf32> to vector<1x1x128xf32>
      %cst_20 = arith.constant dense<0.000000e+00> : vector<1xf32>
      %54 = vector.multi_reduction <add>, %53, %cst_20 [1, 2] : vector<1x1x128xf32> to vector<1xf32>
      %55 = vector.shape_cast %54 : vector<1xf32> to vector<1x1x1xf32>
      %56 = vector.extract %55[0, 0, 0] : f32 from vector<1x1x1xf32>
      %cst_21 = arith.constant 2.187500e-02 : f32
      %57 = arith.mulf %cst_21, %46 : f32
      %cst_22 = arith.constant 3.750000e-02 : f32
      %58 = arith.mulf %cst_22, %51 : f32
      %59 = arith.addf %57, %58 : f32
      %cst_23 = arith.constant 3.750000e-02 : f32
      %60 = arith.mulf %cst_23, %56 : f32
      %61 = arith.addf %59, %60 : f32
      %62 = vector.broadcast %61 : f32 to vector<1x1x1xf32>
      %c0_24 = arith.constant 0 : index
      %c0_25 = arith.constant 0 : index
      %c0_26 = arith.constant 0 : index
      %63 = vector.load %arg4[%c0_24, %c0_25, %c0_26] : memref<1x1x1xf32, #tpu.memory_space<vmem>>, vector<1x1x1xf32>
      tpu.vector_store %arg4[%c0_24, %c0_25, %c0_26], %62 {strides = array<i32>} : memref<1x1x1xf32, #tpu.memory_space<vmem>>, vector<1x1x1xf32>,
    } else {
    }
    return
  }
  func.func @transform_0(%arg0: i32, %arg1: i32) -> (i32, i32) {
    %c1_i32 = arith.constant 1 : i32
    %0 = arith.muli %arg0, %c1_i32 : i32
    %1 = arith.addi %0, %arg1 : i32
    %c0_i32 = arith.constant 0 : i32
    %2 = arith.minsi %1, %c0_i32 : i32
    %c0_i32_0 = arith.constant 0 : i32
    %c0_i32_1 = arith.constant 0 : i32
    return %c0_i32_0, %2 : i32, i32
  }
  func.func @transform_1(%arg0: i32, %arg1: i32) -> (i32, i32) {
    %c1_i32 = arith.constant 1 : i32
    %0 = arith.muli %arg0, %c1_i32 : i32
    %1 = arith.addi %0, %arg1 : i32
    %c0_i32 = arith.constant 0 : i32
    %2 = arith.minsi %1, %c0_i32 : i32
    %c0_i32_0 = arith.constant 0 : i32
    %c0_i32_1 = arith.constant 0 : i32
    return %c0_i32_0, %2 : i32, i32
  }
  func.func @transform_2(%arg0: i32, %arg1: i32) -> (i32, i32, i32) {
    %c0_i32 = arith.constant 0 : i32
    %c0_i32_0 = arith.constant 0 : i32
    %c0_i32_1 = arith.constant 0 : i32
    return %arg0, %c0_i32, %c0_i32_0 : i32, i32, i32
  }
}

</mosaic_0001>

<llo_original>
// kernel: composite_loss.1
$region0: #{composite_loss.1}
  #allocation0 [shape = 'u32[]', space=smem, size = 0x4, offset = 0x4, fixed_abs, tag = 'smem constant byte address 0x4 - core index']
  #allocation1 [shape = 'u32[144,128]{1,0:T(1,128)}', space=vmem, size = 0x12000, scoped, tag = 'internal scratch']
  #allocation2 [shape = 'f32[6,128]{1,0:T(8,128)}', space=vmem, size = 0x1000, scoped, tag = 'scratch operand']
  %s0 = inlined_call_operand.vmem [shape: f32[5,128], index: 0, kind: input, shape index: {}]
  %s1 = inlined_call_operand.vmem [shape: f32[5,128], index: 1, kind: input, shape index: {}]
  %s2 = inlined_call_operand.vmem [shape: f32[2,1,1], index: 2, kind: output, shape index: {}]
  %s3 = sld [smem:[#allocation0]]
  $region49: #{composite_loss.1} parent=0
    _
  %s5 = ssub.s32 1, %s3
  %s6 = scalar_select 0, %s5, %s3
  loop: start=0, step=1, limit=4
  $region2: #{composite_loss.1} parent=0 // loop_pre_header
    _
  $region3: #{composite_loss.1} parent=0 // loop_header
    %s8 = sphi 0, %s12
    %p9 = scmp.ge.s32.totalorder %s8, 4
    %s15 = sphi 0, %s27
    %s16 = sphi 0, %s23
    %s17 = sphi 0, %s15
    %s18 = sphi 0, %s16
    %s19 = sphi 0, %s17
    %s20 = sphi 0, %s18
    %s36 = sphi 0, %s38
    %s39 = sphi 0, %s36
    %s40 = sphi 0, %s39
    %s56 = sphi 0, %s40
    %s68 = sphi 0, %s70
    %s71 = sphi 0, %s68
    %s72 = sphi 0, %s71
    %s88 = sphi 0, %s72
    %s94 = sphi 0, %s96
    %s97 = sphi 0, %s94
    %s98 = sphi 0, %s97
    %s114 = sphi 0, %s98
  $region4: #{composite_loss.1} parent=0 // loop_header_branch
    %11 = sbr.rel (%p9) target = $region8
  $region5: #{composite_loss.1} parent=0 // loop_body
    %s13 = ssub.s32 %s8, 1
    %s14 = ssub.s32 %s8, 2
    %s21 = sadd.s32 1, %s16
    %p22 = scmp.ge.s32.totalorder %s21, 1
    %s23 = scalar_select %p22, 0, %s21
    %s24 = sadd.s32 1, %s15
    %s25 = scalar_select %p22, %s24, %s15
    %p26 = scmp.ge.s32.totalorder %s25, 2
    %s27 = scalar_select %p26, 0, %s25
    %s28 = sadd.s32 %s15, %s16
    %p29 = scmp.lt.s32.totalorder %s28, 0
    %s30 = scalar_select %p29, %s28, 0
    %s31 = sadd.s32 %s27, %s23
    %p32 = scmp.lt.s32.totalorder %s31, 0
    %s33 = scalar_select %p32, %s31, 0
    %s34 = ssub.s32 %s30, %s33
    %p35 = scmp.eq.s32.totalorder %s34, 0
    %s37 = sadd.s32 %s36, 1
    %s38 = scalar_select %p35, %s36, %s37
    %p41 = pneg %p35
    %p42 = scmp.eq.s32.totalorder %s8, 1
    %p43 = por %p41, %p42
    %p44 = scmp.ne.s32.totalorder %s36, %s39
    %p45 = scmp.eq.s32.totalorder %s8, 0
    %p46 = por %p44, %p45
    %p47 = scmp.ne.s32.totalorder %s36, %s39
    %p48 = scmp.eq.s32.totalorder %s13, 1
    %p49 = por %p47, %p48
    %p50 = scmp.ne.s32.totalorder %s39, %s40
    %p51 = scmp.eq.s32.totalorder %s13, 0
    %p52 = por %p50, %p51
    %p53 = scmp.ne.s32.totalorder %s39, %s40
    %p54 = scmp.eq.s32.totalorder %s14, 1
    %p55 = por %p53, %p54
    %p57 = scmp.ne.s32.totalorder %s40, %s56
    %p58 = scmp.eq.s32.totalorder %s14, 0
    %p59 = por %p57, %p58
    %s60 = sadd.s32 %s15, %s16
    %p61 = scmp.lt.s32.totalorder %s60, 0
    %s62 = scalar_select %p61, %s60, 0
    %s63 = sadd.s32 %s27, %s23
    %p64 = scmp.lt.s32.totalorder %s63, 0
    %s65 = scalar_select %p64, %s63, 0
    %s66 = ssub.s32 %s62, %s65
    %p67 = scmp.eq.s32.totalorder %s66, 0
    %s69 = sadd.s32 %s68, 1
    %s70 = scalar_select %p67, %s68, %s69
    %p73 = pneg %p67
    %p74 = scmp.eq.s32.totalorder %s8, 1
    %p75 = por %p73, %p74
    %p76 = scmp.ne.s32.totalorder %s68, %s71
    %p77 = scmp.eq.s32.totalorder %s8, 0
    %p78 = por %p76, %p77
    %p79 = scmp.ne.s32.totalorder %s68, %s71
    %p80 = scmp.eq.s32.totalorder %s13, 1
    %p81 = por %p79, %p80
    %p82 = scmp.ne.s32.totalorder %s71, %s72
    %p83 = scmp.eq.s32.totalorder %s13, 0
    %p84 = por %p82, %p83
    %p85 = scmp.ne.s32.totalorder %s71, %s72
    %p86 = scmp.eq.s32.totalorder %s14, 1
    %p87 = por %p85, %p86
    %p89 = scmp.ne.s32.totalorder %s72, %s88
    %p90 = scmp.eq.s32.totalorder %s14, 0
    %p91 = por %p89, %p90
    %s92 = ssub.s32 %s15, %s27
    %p93 = scmp.eq.s32.totalorder %s92, 0
    %s95 = sadd.s32 %s94, 1
    %s96 = scalar_select %p93, %s94, %s95
    %p99 = pneg %p93
    %p100 = scmp.eq.s32.totalorder %s8, 1
    %p101 = por %p99, %p100
    %p102 = scmp.ne.s32.totalorder %s94, %s97
    %p103 = scmp.eq.s32.totalorder %s8, 0
    %p104 = por %p102, %p103
    %p105 = scmp.ne.s32.totalorder %s94, %s97
    %p106 = scmp.eq.s32.totalorder %s13, 1
    %p107 = por %p105, %p106
    %p108 = scmp.ne.s32.totalorder %s97, %s98
    %p109 = scmp.eq.s32.totalorder %s13, 0
    %p110 = por %p108, %p109
    %p111 = scmp.ne.s32.totalorder %s97, %s98
    %p112 = scmp.eq.s32.totalorder %s14, 1
    %p113 = por %p111, %p112
    %p115 = scmp.ne.s32.totalorder %s98, %s114
    %p116 = scmp.eq.s32.totalorder %s14, 0
    %p117 = por %p115, %p116
    %p118 = scmp.le.s32.totalorder 1, %s8
    %p119 = scmp.lt.s32.totalorder %s8, 3
    %p120 = pnand %p118, %p119
    %p121 = pneg %p120
    // Predicated region
    $region9: #{composite_loss.1} parent=5 // pred_check
      _
    $region10: #{composite_loss.1} parent=5 // pred_check_branch
      %123 = sbr.rel (%p120) target = $region12
    $region11: #{composite_loss.1} parent=5 // pred_region
      %s124 = ssub.s32 %s8, 1
    $region12: #{composite_loss.1} parent=5 // pred_fallthru
      _
    %p125 = scmp.lt.s32.totalorder %s8, 2
    // Predicated region
    $region13: #{composite_loss.1} parent=5 // pred_check
      %p126 = pneg %p125
    $region14: #{composite_loss.1} parent=5 // pred_check_branch
      %128 = sbr.rel (%p126) target = $region16
    $region15: #{composite_loss.1} parent=5 // pred_region
      // Predicated region
      $region17: #{composite_loss.1} parent=15 // pred_check
        %p129 = pneg %p46
      $region18: #{composite_loss.1} parent=15 // pred_check_branch
        %131 = sbr.rel (%p129) target = $region20
      $region19: #{composite_loss.1} parent=15 // pred_region
        %s132 = sadd.s32 %s15, %s16
        %p133 = scmp.lt.s32.totalorder %s132, 0
        %s134 = scalar_select %p133, %s132, 0
        %p135 = scmp.lt.s32.totalorder %s134, 0
        %s136 = scalar_select %p135, %s134, 0
        %s137 = smul.addr %s136, 8
        %s138 = scalar_lea.vmem %s0, %s137
        %s139 = sadd.s32 %s15, %s16
        %p140 = scmp.lt.s32.totalorder %s139, 0
        %s141 = scalar_select %p140, %s139, 0
      $region20: #{composite_loss.1} parent=15 // pred_fallthru
        _
      // Predicated region
      $region21: #{composite_loss.1} parent=15 // pred_check
        %p142 = pneg %p78
      $region22: #{composite_loss.1} parent=15 // pred_check_branch
        %144 = sbr.rel (%p142) target = $region24
      $region23: #{composite_loss.1} parent=15 // pred_region
        %s145 = sadd.s32 %s15, %s16
        %p146 = scmp.lt.s32.totalorder %s145, 0
        %s147 = scalar_select %p146, %s145, 0
        %p148 = scmp.lt.s32.totalorder %s147, 0
        %s149 = scalar_select %p148, %s147, 0
        %s150 = smul.addr %s149, 8
        %s151 = scalar_lea.vmem %s1, %s150
        %s152 = sadd.s32 %s15, %s16
        %p153 = scmp.lt.s32.totalorder %s152, 0
        %s154 = scalar_select %p153, %s152, 0
      $region24: #{composite_loss.1} parent=15 // pred_fallthru
        _
    $region16: #{composite_loss.1} parent=5 // pred_fallthru
      _
    %p155 = scmp.le.s32.totalorder 1, %s8
    %p156 = scmp.lt.s32.totalorder %s8, 3
    %p157 = pnand %p155, %p156
    %p158 = pneg %p157
    // Predicated region
    $region25: #{composite_loss.1} parent=5 // pred_check
      _
    $region26: #{composite_loss.1} parent=5 // pred_check_branch
      %160 = sbr.rel (%p157) target = $region28
    $region27: #{composite_loss.1} parent=5 // pred_region
      %s161 = ssub.s32 %s8, 1
      %s162 = sadd.s32 %s17, %s18
      %p163 = scmp.lt.s32.totalorder %s162, 0
      %s164 = scalar_select %p163, %s162, 0
      %p165 = scmp.lt.s32.totalorder %s164, 0
      %s166 = scalar_select %p165, %s164, 0
      %s167 = smul.addr %s166, 8
      %s168 = scalar_lea.vmem %s0, %s167
      %p169 = pneg %p52
      %p170 = pneg %p49
      %s171 = sadd.s32 %s17, %s18
      %p172 = scmp.lt.s32.totalorder %s171, 0
      %s173 = scalar_select %p172, %s171, 0
      %p174 = scmp.lt.s32.totalorder %s173, 0
      %s175 = scalar_select %p174, %s173, 0
      %s176 = smul.addr %s175, 8
      %s177 = scalar_lea.vmem %s1, %s176
      %p178 = pneg %p84
      %p179 = pneg %p81
      %p180 = pneg %p110
      %p181 = pneg %p107
      %p182 = scmp.lt.s32.totalorder %s17, 1
      %s183 = scalar_select %p182, %s17, 1
      %s184 = scalar_lea.vmem %s2, %s183
      %s185 = sadd.s32 %s17, %s18
      %p186 = scmp.lt.s32.totalorder %s185, 0
      %s187 = scalar_select %p186, %s185, 0
      %p188 = scmp.lt.s32.totalorder %s187, 0
      %s189 = scalar_select %p188, %s187, 0
      %s190 = smul.addr %s189, 8
      %s191 = scalar_lea.vmem %s0, %s190
      %s192 = sadd.s32 %s17, %s18
      %p193 = scmp.lt.s32.totalorder %s192, 0
      %s194 = scalar_select %p193, %s192, 0
      %s195 = sadd.s32 %s17, %s18
      %p196 = scmp.lt.s32.totalorder %s195, 0
      %s197 = scalar_select %p196, %s195, 0
      %p198 = scmp.lt.s32.totalorder %s197, 0
      %s199 = scalar_select %p198, %s197, 0
      %s200 = smul.addr %s199, 8
      %s201 = scalar_lea.vmem %s1, %s200
      %s202 = sadd.s32 %s17, %s18
      %p203 = scmp.lt.s32.totalorder %s202, 0
      %s204 = scalar_select %p203, %s202, 0
      %p205 = scmp.lt.s32.totalorder %s17, 1
      %s206 = scalar_select %p205, %s17, 1
      %s207 = scalar_lea.vmem %s2, %s206
      %p208 = scmp.eq.s32.totalorder %s18, 0
      // Predicated region
      $region29: #{composite_loss.1} parent=27 // pred_check
        %p209 = pneg %p208
      $region30: #{composite_loss.1} parent=27 // pred_check_branch
        %211 = sbr.rel (%p209) target = $region32
      $region31: #{composite_loss.1} parent=27 // pred_region
        %212 = vst [vmem:[#allocation2] sm:$0x3f] 0.0
      $region32: #{composite_loss.1} parent=27 // pred_fallthru
        _
      %s213 = sadd.s32 %s17, %s18
      %s214 = smul.u32 %s213, 128
      %s215 = ssub.s32 8, %s214
      %v216 = vlaneseq
      %v217 = vand.u32 %v216, 127
      %v218 = vstv %s215
      %vm219 = vcmp.lt.s32.totalorder %v217, %v218
      %v220 = vld [vmem:[%s191] sm:$0x1f]
      %v221 = vsel %vm219, 1, 0
      %vm222 = vcmp.eq.s32.totalorder %v221, 1
      %v223 = vsel %vm222, %v220, 0.0
      %v224 = vld [vmem:[%s201] sm:$0x1f]
      %v225 = vsel %vm222, %v224, 0.0
      %v226 = vsub.f32 %v223, %v225
      %v227 = vld [vmem:[#allocation2] sm:$0x1f]
      %v228 = vmul.f32 %v226, %v226
      %v229 = vadd.f32 %v227, %v228
      %230 = vst [vmem:[#allocation2] sm:$0x1f] %v229
      %vm231 = vcmask 1043456
      %v232 = vsel %vm231, %v223, 0.0
      %v233 = vrot.slane %v232, 4
      %v234 = vadd.f32 %v232, %v233
      %v235 = vrot.slane %v234, 2
      %v236 = vadd.f32 %v234, %v235
      %v237 = vrot.slane %v236, 1
      %v238 = vadd.f32 %v236, %v237
      %v239 = vsub.f32 %v223, %v238
      %v240 = vand.u32 2147483647, %v239
      %v241 = vand.u32 2147483647, %v223
      %v242 = vadd.f32 %v241, 1.0
      %v243 = vrcp.pop %v242
      %v244 = vmul.f32 %v240, %v243
      %v245 = vld [vmem:[#allocation2 + $0x5] sm:$0x1]
      %v247 = vrot.slane %v244, 4
      %v249 = vadd.f32 %v245, %v247
      %250 = vst [vmem:[#allocation2 + $0x5] sm:$0x1] %v249
      // Predicated region
      $region33: #{composite_loss.1} parent=27 // pred_check
        %p251 = pneg %p208
      $region34: #{composite_loss.1} parent=27 // pred_check_branch
        %253 = sbr.rel (%p251) target = $region36
      $region35: #{composite_loss.1} parent=27 // pred_region
        %v254 = vld [vmem:[#allocation2] sm:$0x3f]
        %v255 = vsel %vm231, %v254, 0.0
        %256 = vadd.xlane.f32.xlu0 %v255
        %v257 = vpop.xlane.xlu0 %256
        %v258 = vrot.slane %v257, 4
        %v259 = vadd.f32 %v257, %v258
        %v260 = vrot.slane %v259, 2
        %v261 = vadd.f32 %v259, %v260
        %v262 = vrot.slane %v261, 1
        %v263 = vadd.f32 %v261, %v262
        %s264 = vtos %v263
        %v266 = vrot.slane %v254, 4
        %vm268 = vcmask 1040384
        %v269 = vsel %vm268, %v266, 0.0
        %270 = vadd.xlane.f32.xlu0 %v269
        %v271 = vpop.xlane.xlu0 %270
        %v272 = vrot.slane %v271, 4
        %v273 = vadd.f32 %v271, %v272
        %v274 = vrot.slane %v273, 2
        %v275 = vadd.f32 %v273, %v274
        %v276 = vrot.slane %v275, 1
        %v277 = vadd.f32 %v275, %v276
        %s278 = vtos %v277
        %v279 = vrot.slane %v254, 5
        %v281 = vsel %vm268, %v279, 0.0
        %282 = vadd.xlane.f32.xlu0 %v281
        %v283 = vpop.xlane.xlu0 %282
        %v284 = vrot.slane %v283, 4
        %v285 = vadd.f32 %v283, %v284
        %v286 = vrot.slane %v285, 2
        %v287 = vadd.f32 %v285, %v286
        %v288 = vrot.slane %v287, 1
        %v289 = vadd.f32 %v287, %v288
        %s290 = vtos %v289
        %s291 = smul.f32 %s264, 0.021875
        %s292 = smul.f32 %s278, 0.0375
        %s293 = sadd.f32 %s291, %s292
        %s294 = smul.f32 %s290, 0.0375
        %s295 = sadd.f32 %s293, %s294
        %v296 = vstv %s295
        %vm297 = vcmask 0
        %298 = vst.msk [vmem:[%s207] sm:$0x1] %vm297, %v296
      $region36: #{composite_loss.1} parent=27 // pred_fallthru
        _
      %p299 = scmp.lt.s32.totalorder %s17, 1
      %s300 = scalar_select %p299, %s17, 1
      %s301 = scalar_lea.vmem %s2, %s300
      // Predicated region
      $region37: #{composite_loss.1} parent=27 // pred_check
        %p302 = pneg %p107
      $region38: #{composite_loss.1} parent=27 // pred_check_branch
        %304 = sbr.rel (%p302) target = $region40
      $region39: #{composite_loss.1} parent=27 // pred_region
        _
      $region40: #{composite_loss.1} parent=27 // pred_fallthru
        _
    $region28: #{composite_loss.1} parent=5 // pred_fallthru
      _
    %p305 = scmp.le.s32.totalorder 2, %s8
    // Predicated region
    $region41: #{composite_loss.1} parent=5 // pred_check
      %p306 = pneg %p305
    $region42: #{composite_loss.1} parent=5 // pred_check_branch
      %308 = sbr.rel (%p306) target = $region44
    $region43: #{composite_loss.1} parent=5 // pred_region
      %s309 = ssub.s32 %s8, 2
      // Predicated region
      $region45: #{composite_loss.1} parent=43 // pred_check
        %p310 = pneg %p113
      $region46: #{composite_loss.1} parent=43 // pred_check_branch
        %312 = sbr.rel (%p310) target = $region48
      $region47: #{composite_loss.1} parent=43 // pred_region
        %p313 = scmp.lt.s32.totalorder %s19, 1
        %s314 = scalar_select %p313, %s19, 1
        %s315 = scalar_lea.vmem %s2, %s314
      $region48: #{composite_loss.1} parent=43 // pred_fallthru
        _
    $region44: #{composite_loss.1} parent=5 // pred_fallthru
      _
  $region6: #{composite_loss.1} parent=0 // loop_footer
    %s12 = sadd.s32 1, %s8
  $region7: #{composite_loss.1} parent=0 // loop_footer_branch
    %7 = sbr.rel target = $region3
  $region8: #{composite_loss.1} parent=0 // loop_exit
    _

</llo_original>
